<compile_context>
chip_gen: v7x
topology: tpu7x:2x2x1
jax: 0.10.0
libtpu: 0.0.40
codegen_flags: <defaults>
</compile_context>

<pallas_src>
import jax
import jax.numpy as jnp
from jax import lax
from jax.experimental import pallas as pl
from jax.experimental.pallas import tpu as pltpu

LN_EPS = 1e-5  # PyTorch nn.LayerNorm default


def _round_down(v, m):
    return (v // m) * m


def _round_up(v, m):
    return ((v + m - 1) // m) * m


def _pre_layer_norm_kernel(x_ref, w_ref, b_ref, g_ref, beta_ref, o_ref):
    # x_ref: (TR, D) tile of flattened rows.
    # func(x): Linear(D, D) -> y = x @ W + b  (MXU operands in W's dtype,
    # f32 accumulation).
    y = jnp.dot(x_ref[...].astype(w_ref.dtype), w_ref[...],
                preferred_element_type=jnp.float32)
    y = y + b_ref[...]

    # LayerNorm over the lane dim (two-pass variance: matches PyTorch's
    # nn.LayerNorm, no E[y^2]-mean^2 cancellation).
    mean = jnp.mean(y, axis=-1, keepdims=True)
    centered = y - mean
    var = jnp.mean(centered * centered, axis=-1, keepdims=True)
    inv = lax.rsqrt(var + LN_EPS)          # EUP slot -> effectively free
    normed = centered * inv * g_ref[...] + beta_ref[...]

    # Residual add: re-read x and cast to f32 only here (no f32 copy of x kept
    # live across the matmul + LN), then cast to the output dtype.
    # NOTE: on a ragged last tile the padded rows compute garbage LN values,
    # but LN is row-independent and the padded output region is discarded.
    o_ref[...] = (normed + x_ref[...].astype(jnp.float32)).astype(o_ref.dtype)


def pre_layer_norm(x, w, b, gamma, beta, *, tile_rows=None):
    """Fused LayerNorm(x @ W + b) + x.

    x: (B, S, D) (f32 or bf16); w: (D, D) (bf16 recommended);
    b, gamma, beta: (D,).  D must be a multiple of 128 (lane width).
    tile_rows=None -> auto-sized row tile (~1 MiB/block, fitted to VMEM).
    """
    B, S, D = x.shape
    N = B * S
    if D % 128 != 0:
        raise ValueError("D must be a multiple of 128 (lane width) for this kernel")

    x2 = x.reshape(N, D)
    b2 = b.reshape(1, D).astype(jnp.float32)
    g2 = gamma.reshape(1, D).astype(jnp.float32)
    beta2 = beta.reshape(1, D).astype(jnp.float32)

    x_item = jnp.dtype(x.dtype).itemsize
    w_item = jnp.dtype(w.dtype).itemsize
    # bf16 packs two rows per sublane -> keep row tiles 16-aligned for bf16 I/O.
    align = 16 if x_item < 4 else 8

    # --- per-generation VMEM budget -----------------------------------------
    try:  # 64 MiB/TC on v7x, 128 MiB on v5e/v6e
        vmem_total = int(getattr(pltpu.get_tpu_info(), "vmem_capacity_bytes",
                                 64 << 20))
    except Exception:
        vmem_total = 64 << 20                  # conservative fallback
    vmem_cap = (vmem_total * 3) // 4           # leave ~25% headroom

    # --- footprint model (bytes) ---------------------------------------------
    # constants: W + b/gamma/beta, single-buffered whole-array VMEM residents
    const_bytes = D * D * w_item + 3 * D * 4
    # per row: x/out tiles (double-buffered) + ~4 f32 (tr, D) intermediates
    per_row = 4 * D * x_item + 16 * D

    # --- row-tile selection ----------------------------------------------------
    if tile_rows is None:
        # ~1 MiB per x block so per-step overhead amortizes; never below 256 rows.
        tr = max(256, (1 << 20) // (D * x_item))
    else:
        tr = int(tile_rows)
    # keep >= ~8 grid steps when there are enough rows (pipeline depth / megacore)
    steps_target = 8
    if N >= steps_target * 256:
        tr = min(tr, max(256, pl.cdiv(N, steps_target)))
    tr = min(tr, _round_up(N, align))          # never larger than the row count
    # closed-form fit under the VMEM budget (no halving overshoot)
    tr_fit = max(align, (vmem_cap - const_bytes - (4 << 20)) // per_row)
    tr = max(align, _round_down(min(tr, tr_fit), align))
    # TODO(synk): for very large D (bf16 D >~ 4096 on v7x) resident W no longer
    # fits; tile W along output columns with an inner pltpu.emit_pipeline
    # accumulating into a (tr, D) f32 scratch before the LN + residual pass.

    grid = (pl.cdiv(N, tr),)  # ragged last tile handled by Pallas block padding
    vmem_limit = int(min(max(const_bytes + per_row * tr + (4 << 20), 32 << 20),
                         vmem_cap))

    out = pl.pallas_call(
        _pre_layer_norm_kernel,
        out_shape=jax.ShapeDtypeStruct((N, D), x.dtype),
        grid_spec=pltpu.PrefetchScalarGridSpec(
            num_scalar_prefetch=0,
            grid=grid,
            in_specs=[
                # x rows: pipelined (double-buffered) row tiles.
                pl.BlockSpec((tr, D), lambda i: (i, 0)),
                # W / b / gamma / beta: whole-array VMEM residents -> one DMA,
                # one buffer (no double-buffer waste on constant operands).
                pl.BlockSpec(memory_space=pltpu.MemorySpace.VMEM),
                pl.BlockSpec(memory_space=pltpu.MemorySpace.VMEM),
                pl.BlockSpec(memory_space=pltpu.MemorySpace.VMEM),
                pl.BlockSpec(memory_space=pltpu.MemorySpace.VMEM),
            ],
            out_specs=pl.BlockSpec((tr, D), lambda i: (i, 0)),
        ),
        compiler_params=pltpu.CompilerParams(
            # TODO(synk): on v7x confirm the row axis actually shards across both
            # TensorCores; if not, switch to pltpu.CORE_PARALLEL / pl.core_map.
            dimension_semantics=("parallel",),
            vmem_limit_bytes=vmem_limit,
        ),
    )(x2, w, b2, g2, beta2)

    return out.reshape(B, S, D)


def _reference(x, w, b, gamma, beta):
    xf = x.astype(jnp.float32)
    # Match the kernel's matmul precision: operands rounded to w.dtype,
    # accumulation in f32.
    y = jnp.einsum(
        "bsd,de->bse",
        xf.astype(w.dtype).astype(jnp.float32),
        w.astype(jnp.float32),
        preferred_element_type=jnp.float32,
    ) + b.astype(jnp.float32)
    mean = jnp.mean(y, axis=-1, keepdims=True)
    var = jnp.mean((y - mean) ** 2, axis=-1, keepdims=True)
    normed = (y - mean) * lax.rsqrt(var + LN_EPS) * gamma + beta
    return (normed + xf).astype(x.dtype)


if __name__ == "__main__":
    # Small but representative: lane-dense hidden (multiple of 128) and a row
    # count (400) that also exercises the ragged-last-tile path when a small
    # explicit tile is forced.
    B, S, D = 2, 200, 128

    key = jax.random.PRNGKey(0)
    kx, kw, kb = jax.random.split(key, 3)

    x = jax.random.normal(kx, (B, S, D), dtype=jnp.float32)

    # func := Linear(D, D); weight kept in bf16 (native MXU dtype), cast once on
    # the host. LayerNorm gamma=1, beta=0.
    w = (jax.random.normal(kw, (D, D), dtype=jnp.float32) / jnp.sqrt(D)).astype(
        jnp.bfloat16)
    b = jax.random.normal(kb, (D,), dtype=jnp.float32) * 0.01
    gamma = jnp.ones((D,), dtype=jnp.float32)
    beta = jnp.zeros((D,), dtype=jnp.float32)

    ref = _reference(x, w, b, gamma, beta)

    # 1) auto-sized row tile (whole 400-row slab in one step here)
    out = pre_layer_norm(x, w, b, gamma, beta)
    out = jax.block_until_ready(out)
    assert out.shape == (B, S, D)
    assert jnp.allclose(out, ref, atol=1e-3, rtol=1e-3), "mismatch vs reference (auto tile)"

    # 2) forced small tile -> 4 grid steps with a ragged 16-row last tile
    out2 = pre_layer_norm(x, w, b, gamma, beta, tile_rows=128)
    out2 = jax.block_until_ready(out2)
    assert jnp.allclose(out2, ref, atol=1e-3, rtol=1e-3), "mismatch vs reference (ragged tile)"

    print("KERNEL_OK")
</pallas_src>

<mosaic_0001>
module attributes {stable_mosaic.version = 11 : i64} {
  func.func @_pre_layer_norm_kernel(%arg0: i32, %arg1: memref<400x128xf32, #tpu.memory_space<vmem>>, %arg2: memref<128x128xbf16, #tpu.memory_space<vmem>>, %arg3: memref<1x128xf32, #tpu.memory_space<vmem>>, %arg4: memref<1x128xf32, #tpu.memory_space<vmem>>, %arg5: memref<1x128xf32, #tpu.memory_space<vmem>>, %arg6: memref<400x128xf32, #tpu.memory_space<vmem>>) attributes {dimension_semantics = [#tpu.dimension_semantics<parallel>], iteration_bounds = array<i64: 1>, scalar_prefetch = 0 : i64, scratch_operands = 0 : i64, tpu.core_type = #tpu.core_type<tc>, window_params = [{transform_indices = @transform_0, window_bounds = array<i64: 400, 128>}, {pipeline_mode = #tpu.pipeline_mode<synchronous>, transform_indices = @transform_1, window_bounds = array<i64: 128, 128>}, {pipeline_mode = #tpu.pipeline_mode<synchronous>, transform_indices = @transform_2, window_bounds = array<i64: 1, 128>}, {pipeline_mode = #tpu.pipeline_mode<synchronous>, transform_indices = @transform_3, window_bounds = array<i64: 1, 128>}, {pipeline_mode = #tpu.pipeline_mode<synchronous>, transform_indices = @transform_4, window_bounds = array<i64: 1, 128>}, {transform_indices = @transform_5, window_bounds = array<i64: 400, 128>}]} {
    %c0 = arith.constant 0 : index
    %c0_0 = arith.constant 0 : index
    %0 = vector.load %arg1[%c0, %c0_0] : memref<400x128xf32, #tpu.memory_space<vmem>>, vector<400x128xf32>
    %1 = arith.truncf %0 : vector<400x128xf32> to vector<400x128xbf16>
    %c0_1 = arith.constant 0 : index
    %c0_2 = arith.constant 0 : index
    %2 = vector.load %arg2[%c0_1, %c0_2] : memref<128x128xbf16, #tpu.memory_space<vmem>>, vector<128x128xbf16>
    %cst = arith.constant dense<0.000000e+00> : vector<400x128xf32>
    %3 = tpu.matmul %1, %2, %cst {dimension_numbers = #tpu.dot_dimension_numbers<[1], [0], [0], [1], [0, 0, 1, 1], [], []>} : vector<400x128xbf16>, vector<128x128xbf16>, vector<400x128xf32> -> vector<400x128xf32>
    %c0_3 = arith.constant 0 : index
    %c0_4 = arith.constant 0 : index
    %4 = vector.load %arg3[%c0_3, %c0_4] : memref<1x128xf32, #tpu.memory_space<vmem>>, vector<1x128xf32>
    %5 = vector.broadcast %4 : vector<1x128xf32> to vector<400x128xf32>
    %6 = arith.addf %3, %5 : vector<400x128xf32>
    %cst_5 = arith.constant dense<0.000000e+00> : vector<400xf32>
    %7 = vector.multi_reduction <add>, %6, %cst_5 [1] : vector<400x128xf32> to vector<400xf32>
    %8 = vector.shape_cast %7 : vector<400xf32> to vector<400x1xf32>
    %cst_6 = arith.constant 1.280000e+02 : f32
    %9 = vector.broadcast %cst_6 : f32 to vector<400x1xf32>
    %10 = arith.divf %8, %9 : vector<400x1xf32>
    %11 = vector.broadcast %10 : vector<400x1xf32> to vector<400x128xf32>
    %12 = arith.subf %6, %11 : vector<400x128xf32>
    %13 = arith.mulf %12, %12 : vector<400x128xf32>
    %cst_7 = arith.constant dense<0.000000e+00> : vector<400xf32>
    %14 = vector.multi_reduction <add>, %13, %cst_7 [1] : vector<400x128xf32> to vector<400xf32>
    %15 = vector.shape_cast %14 : vector<400xf32> to vector<400x1xf32>
    %cst_8 = arith.constant 1.280000e+02 : f32
    %16 = vector.broadcast %cst_8 : f32 to vector<400x1xf32>
    %17 = arith.divf %15, %16 : vector<400x1xf32>
    %cst_9 = arith.constant 9.99999974E-6 : f32
    %18 = vector.broadcast %cst_9 : f32 to vector<400x1xf32>
    %19 = arith.addf %17, %18 : vector<400x1xf32>
    %20 = math.rsqrt %19 : vector<400x1xf32>
    %21 = vector.broadcast %20 : vector<400x1xf32> to vector<400x128xf32>
    %22 = arith.mulf %12, %21 : vector<400x128xf32>
    %c0_10 = arith.constant 0 : index
    %c0_11 = arith.constant 0 : index
    %23 = vector.load %arg4[%c0_10, %c0_11] : memref<1x128xf32, #tpu.memory_space<vmem>>, vector<1x128xf32>
    %24 = vector.broadcast %23 : vector<1x128xf32> to vector<400x128xf32>
    %25 = arith.mulf %22, %24 : vector<400x128xf32>
    %c0_12 = arith.constant 0 : index
    %c0_13 = arith.constant 0 : index
    %26 = vector.load %arg5[%c0_12, %c0_13] : memref<1x128xf32, #tpu.memory_space<vmem>>, vector<1x128xf32>
    %27 = vector.broadcast %26 : vector<1x128xf32> to vector<400x128xf32>
    %28 = arith.addf %25, %27 : vector<400x128xf32>
    %c0_14 = arith.constant 0 : index
    %c0_15 = arith.constant 0 : index
    %29 = vector.load %arg1[%c0_14, %c0_15] : memref<400x128xf32, #tpu.memory_space<vmem>>, vector<400x128xf32>
    %30 = arith.addf %28, %29 : vector<400x128xf32>
    %c0_16 = arith.constant 0 : index
    %c0_17 = arith.constant 0 : index
    %31 = vector.load %arg6[%c0_16, %c0_17] : memref<400x128xf32, #tpu.memory_space<vmem>>, vector<400x128xf32>
    tpu.vector_store %arg6[%c0_16, %c0_17], %30 {strides = array<i32>} : memref<400x128xf32, #tpu.memory_space<vmem>>, vector<400x128xf32>,
    return
  }
  func.func @transform_0(%arg0: i32) -> (i32, i32) {
    %c0_i32 = arith.constant 0 : i32
    %c0_i32_0 = arith.constant 0 : i32
    return %arg0, %c0_i32 : i32, i32
  }
  func.func @transform_1(%arg0: i32) -> (i32, i32) {
    %c0_i32 = arith.constant 0 : i32
    %c0_i32_0 = arith.constant 0 : i32
    %c0_i32_1 = arith.constant 0 : i32
    return %c0_i32, %c0_i32_0 : i32, i32
  }
  func.func @transform_2(%arg0: i32) -> (i32, i32) {
    %c0_i32 = arith.constant 0 : i32
    %c0_i32_0 = arith.constant 0 : i32
    %c0_i32_1 = arith.constant 0 : i32
    return %c0_i32, %c0_i32_0 : i32, i32
  }
  func.func @transform_3(%arg0: i32) -> (i32, i32) {
    %c0_i32 = arith.constant 0 : i32
    %c0_i32_0 = arith.constant 0 : i32
    %c0_i32_1 = arith.constant 0 : i32
    return %c0_i32, %c0_i32_0 : i32, i32
  }
  func.func @transform_4(%arg0: i32) -> (i32, i32) {
    %c0_i32 = arith.constant 0 : i32
    %c0_i32_0 = arith.constant 0 : i32
    %c0_i32_1 = arith.constant 0 : i32
    return %c0_i32, %c0_i32_0 : i32, i32
  }
  func.func @transform_5(%arg0: i32) -> (i32, i32) {
    %c0_i32 = arith.constant 0 : i32
    %c0_i32_0 = arith.constant 0 : i32
    return %arg0, %c0_i32 : i32, i32
  }
}

</mosaic_0001>

<llo_original>
// kernel: tpu_custom_call.1
$region0: #{tpu_custom_call.1}
  #allocation0 [shape = 'u32[]', space=smem, size = 0x4, offset = 0x4, fixed_abs, tag = 'smem constant byte address 0x4 - core index']
  #allocation1 [shape = 'u32[144,128]{1,0:T(1,128)}', space=vmem, size = 0x12000, scoped, tag = 'internal scratch']
  %s0 = inlined_call_operand.hbm [shape: f32[400,128], index: 0, kind: input, shape index: {}]
  %s1 = inlined_call_operand.hbm [shape: bf16[128,128], index: 1, kind: input, shape index: {}]
  %s2 = inlined_call_operand.vmem [shape: f32[1,128], index: 2, kind: input, shape index: {}]
  %s3 = inlined_call_operand.vmem [shape: f32[1,128], index: 3, kind: input, shape index: {}]
  %s4 = inlined_call_operand.vmem [shape: f32[1,128], index: 4, kind: input, shape index: {}]
  %s5 = inlined_call_operand.hbm [shape: f32[400,128], index: 5, kind: output, shape index: {}]
  %s6 = sld [smem:[#allocation0]]
  $region38: #{tpu_custom_call.1} parent=0
    _
  %s8 = ssub.s32 1, %s6
  %s9 = scalar_select 0, %s8, %s6
  $region1: #{tpu_custom_call.1} parent=0
    #allocation2 [shape = 'u8[204800]{0}', space=vmem, size = 0x32000, scoped, tag = 'input window, operand 0, single buffered']
    #allocation3 [shape = 's32[1]{0}', space=sflag, size = 0x4, scoped, tag = 'scoped memory for tpu_custom_call.1']
    #allocation4 [shape = 's32[1]{0}', space=sflag, size = 0x4, scoped, tag = 'scoped memory for tpu_custom_call.1']
    #allocation5 [shape = 'u8[32768]{0}', space=vmem, size = 0x8000, scoped, tag = 'input window, operand 1, single buffered']
    #allocation6 [shape = 's32[1]{0}', space=sflag, size = 0x4, scoped, tag = 'scoped memory for tpu_custom_call.1']
    #allocation7 [shape = 'u8[204800]{0}', space=vmem, size = 0x32000, scoped, tag = 'output window, operand 0, single buffered']
    %10 = vsyncpa [#allocation3], 0
    %11 = vsyncpa [#allocation6], 0
    %12 = vsyncpa [#allocation4], 0
    // Predicated region
    $region2: #{tpu_custom_call.1} parent=1 // pred_check
      _
    $region3: #{tpu_custom_call.1} parent=1 // pred_check_branch
      %14 = sbr.rel (0) target = $region5
    $region4: #{tpu_custom_call.1} parent=1 // pred_region
      %s16 = ssub.s32 6400, 6400
      %17 = vsyncadd [#allocation3], %s16
      %s18 = sshll.u32 [#allocation2], 4
      %s19 = int_to_ptr.vmem [resolvable:$true] %s18
      %24 = dma.hbm_to_vmem [thread:$0]  %s0, 6400, %s19, [#allocation3], 128, 128, 8
    $region5: #{tpu_custom_call.1} parent=1 // pred_fallthru
      _
    // Predicated region
    $region6: #{tpu_custom_call.1} parent=1 // pred_check
      _
    $region7: #{tpu_custom_call.1} parent=1 // pred_check_branch
      %26 = sbr.rel (0) target = $region9
    $region8: #{tpu_custom_call.1} parent=1 // pred_region
      %s28 = ssub.s32 1024, 1024
      %29 = vsyncadd [#allocation6], %s28
      %s30 = sshll.u32 [#allocation5], 4
      %s31 = int_to_ptr.vmem [resolvable:$true] %s30
      %36 = dma.hbm_to_vmem [thread:$0]  %s1, 1024, %s31, [#allocation6], 64, 64, 4
    $region9: #{tpu_custom_call.1} parent=1 // pred_fallthru
      _
    // Predicated region
    $region10: #{tpu_custom_call.1} parent=1 // pred_check
      _
    $region11: #{tpu_custom_call.1} parent=1 // pred_check_branch
      %38 = sbr.rel (0) target = $region13
    $region12: #{tpu_custom_call.1} parent=1 // pred_region
      _
    $region13: #{tpu_custom_call.1} parent=1 // pred_fallthru
      _
    // Predicated region
    $region14: #{tpu_custom_call.1} parent=1 // pred_check
      _
    $region15: #{tpu_custom_call.1} parent=1 // pred_check_branch
      %40 = sbr.rel (0) target = $region17
    $region16: #{tpu_custom_call.1} parent=1 // pred_region
      _
    $region17: #{tpu_custom_call.1} parent=1 // pred_fallthru
      _
    // Predicated region
    $region18: #{tpu_custom_call.1} parent=1 // pred_check
      _
    $region19: #{tpu_custom_call.1} parent=1 // pred_check_branch
      %42 = sbr.rel (0) target = $region21
    $region20: #{tpu_custom_call.1} parent=1 // pred_region
      _
    $region21: #{tpu_custom_call.1} parent=1 // pred_fallthru
      _
    // Predicated region
    $region22: #{tpu_custom_call.1} parent=1 // pred_check
      _
    $region23: #{tpu_custom_call.1} parent=1 // pred_check_branch
      %44 = sbr.rel (0) target = $region25
    $region24: #{tpu_custom_call.1} parent=1 // pred_region
      %45 = dma.done [#allocation3], 6400
    $region25: #{tpu_custom_call.1} parent=1 // pred_fallthru
      _
    // Predicated region
    $region26: #{tpu_custom_call.1} parent=1 // pred_check
      _
    $region27: #{tpu_custom_call.1} parent=1 // pred_check_branch
      %47 = sbr.rel (0) target = $region29
    $region28: #{tpu_custom_call.1} parent=1 // pred_region
      %48 = dma.done [#allocation6], 1024
    $region29: #{tpu_custom_call.1} parent=1 // pred_fallthru
      _
    %v50 = vld [vmem:[#allocation2] sm:$0xff]
    %v51 = vld [vmem:[#allocation2 + $0x8] sm:$0xff]
    %v52 = vld [vmem:[#allocation2 + $0x10] sm:$0xff]
    %v53 = vld [vmem:[#allocation2 + $0x18] sm:$0xff]
    %v54 = vld [vmem:[#allocation2 + $0x20] sm:$0xff]
    %v55 = vld [vmem:[#allocation2 + $0x28] sm:$0xff]
    %v56 = vld [vmem:[#allocation2 + $0x30] sm:$0xff]
    %v57 = vld [vmem:[#allocation2 + $0x38] sm:$0xff]
    %v58 = vld [vmem:[#allocation2 + $0x40] sm:$0xff]
    %v59 = vld [vmem:[#allocation2 + $0x48] sm:$0xff]
    %v60 = vld [vmem:[#allocation2 + $0x50] sm:$0xff]
    %v61 = vld [vmem:[#allocation2 + $0x58] sm:$0xff]
    %v62 = vld [vmem:[#allocation2 + $0x60] sm:$0xff]
    %v63 = vld [vmem:[#allocation2 + $0x68] sm:$0xff]
    %v64 = vld [vmem:[#allocation2 + $0x70] sm:$0xff]
    %v65 = vld [vmem:[#allocation2 + $0x78] sm:$0xff]
    %v66 = vld [vmem:[#allocation2 + $0x80] sm:$0xff]
    %v67 = vld [vmem:[#allocation2 + $0x88] sm:$0xff]
    %v68 = vld [vmem:[#allocation2 + $0x90] sm:$0xff]
    %v69 = vld [vmem:[#allocation2 + $0x98] sm:$0xff]
    %v70 = vld [vmem:[#allocation2 + $0xa0] sm:$0xff]
    %v71 = vld [vmem:[#allocation2 + $0xa8] sm:$0xff]
    %v72 = vld [vmem:[#allocation2 + $0xb0] sm:$0xff]
    %v73 = vld [vmem:[#allocation2 + $0xb8] sm:$0xff]
    %v74 = vld [vmem:[#allocation2 + $0xc0] sm:$0xff]
    %v75 = vld [vmem:[#allocation2 + $0xc8] sm:$0xff]
    %v76 = vld [vmem:[#allocation2 + $0xd0] sm:$0xff]
    %v77 = vld [vmem:[#allocation2 + $0xd8] sm:$0xff]
    %v78 = vld [vmem:[#allocation2 + $0xe0] sm:$0xff]
    %v79 = vld [vmem:[#allocation2 + $0xe8] sm:$0xff]
    %v80 = vld [vmem:[#allocation2 + $0xf0] sm:$0xff]
    %v81 = vld [vmem:[#allocation2 + $0xf8] sm:$0xff]
    %v82 = vld [vmem:[#allocation2 + $0x100] sm:$0xff]
    %v83 = vld [vmem:[#allocation2 + $0x108] sm:$0xff]
    %v84 = vld [vmem:[#allocation2 + $0x110] sm:$0xff]
    %v85 = vld [vmem:[#allocation2 + $0x118] sm:$0xff]
    %v86 = vld [vmem:[#allocation2 + $0x120] sm:$0xff]
    %v87 = vld [vmem:[#allocation2 + $0x128] sm:$0xff]
    %v88 = vld [vmem:[#allocation2 + $0x130] sm:$0xff]
    %v89 = vld [vmem:[#allocation2 + $0x138] sm:$0xff]
    %v90 = vld [vmem:[#allocation2 + $0x140] sm:$0xff]
    %v91 = vld [vmem:[#allocation2 + $0x148] sm:$0xff]
    %v92 = vld [vmem:[#allocation2 + $0x150] sm:$0xff]
    %v93 = vld [vmem:[#allocation2 + $0x158] sm:$0xff]
    %v94 = vld [vmem:[#allocation2 + $0x160] sm:$0xff]
    %v95 = vld [vmem:[#allocation2 + $0x168] sm:$0xff]
    %v96 = vld [vmem:[#allocation2 + $0x170] sm:$0xff]
    %v97 = vld [vmem:[#allocation2 + $0x178] sm:$0xff]
    %v98 = vld [vmem:[#allocation2 + $0x180] sm:$0xff]
    %v99 = vld [vmem:[#allocation2 + $0x188] sm:$0xff]
    %v100 = vpack.c.bf16 %v51, %v50
    %v101 = vpack.c.bf16 %v53, %v52
    %v102 = vpack.c.bf16 %v55, %v54
    %v103 = vpack.c.bf16 %v57, %v56
    %v104 = vpack.c.bf16 %v59, %v58
    %v105 = vpack.c.bf16 %v61, %v60
    %v106 = vpack.c.bf16 %v63, %v62
    %v107 = vpack.c.bf16 %v65, %v64
    %v108 = vpack.c.bf16 %v67, %v66
    %v109 = vpack.c.bf16 %v69, %v68
    %v110 = vpack.c.bf16 %v71, %v70
    %v111 = vpack.c.bf16 %v73, %v72
    %v112 = vpack.c.bf16 %v75, %v74
    %v113 = vpack.c.bf16 %v77, %v76
    %v114 = vpack.c.bf16 %v79, %v78
    %v115 = vpack.c.bf16 %v81, %v80
    %v116 = vpack.c.bf16 %v83, %v82
    %v117 = vpack.c.bf16 %v85, %v84
    %v118 = vpack.c.bf16 %v87, %v86
    %v119 = vpack.c.bf16 %v89, %v88
    %v120 = vpack.c.bf16 %v91, %v90
    %v121 = vpack.c.bf16 %v93, %v92
    %v122 = vpack.c.bf16 %v95, %v94
    %v123 = vpack.c.bf16 %v97, %v96
    %v124 = vpack.c.bf16 %v99, %v98
    %v125 = vld [vmem:[#allocation5] sm:$0xf]
    %v126 = vld [vmem:[#allocation5 + $0x4] sm:$0xf]
    %v127 = vld [vmem:[#allocation5 + $0x8] sm:$0xf]
    %v128 = vld [vmem:[#allocation5 + $0xc] sm:$0xf]
    %v129 = vld [vmem:[#allocation5 + $0x10] sm:$0xf]
    %v130 = vld [vmem:[#allocation5 + $0x14] sm:$0xf]
    %v131 = vld [vmem:[#allocation5 + $0x18] sm:$0xf]
    %v132 = vld [vmem:[#allocation5 + $0x1c] sm:$0xf]
    %v133 = vld [vmem:[#allocation5 + $0x20] sm:$0xf]
    %v134 = vld [vmem:[#allocation5 + $0x24] sm:$0xf]
    %v135 = vld [vmem:[#allocation5 + $0x28] sm:$0xf]
    %v136 = vld [vmem:[#allocation5 + $0x2c] sm:$0xf]
    %v137 = vld [vmem:[#allocation5 + $0x30] sm:$0xf]
    %v138 = vld [vmem:[#allocation5 + $0x34] sm:$0xf]
    %v139 = vld [vmem:[#allocation5 + $0x38] sm:$0xf]
    %v140 = vld [vmem:[#allocation5 + $0x3c] sm:$0xf]
    %v141 = vld [vmem:[%s2] sm:$0x1]
    %v143 = vlaneseq
    %v144 = vshrl.u32 %v143, 7
    %v145 = vsub.s32 0, %v144
    %v146 = vrot.slane %v141, %v145
    %v164 = vunpack.c.l.b16 %v125
    %v165 = vunpack.c.l.b16 %v126
    %v166 = vunpack.c.l.b16 %v127
    %v167 = vunpack.c.l.b16 %v128
    %v168 = vunpack.c.l.b16 %v129
    %v169 = vunpack.c.l.b16 %v130
    %v170 = vunpack.c.l.b16 %v131
    %v171 = vunpack.c.l.b16 %v132
    %v172 = vunpack.c.l.b16 %v133
    %v173 = vunpack.c.l.b16 %v134
    %v174 = vunpack.c.l.b16 %v135
    %v175 = vunpack.c.l.b16 %v136
    %v176 = vunpack.c.l.b16 %v137
    %v177 = vunpack.c.l.b16 %v138
    %v178 = vunpack.c.l.b16 %v139
    %v179 = vunpack.c.l.b16 %v140
    %v180 = vpack.c.b16 %v165, %v164
    %v181 = vpack.c.b16 %v167, %v166
    %v182 = vpack.c.b16 %v169, %v168
    %v183 = vpack.c.b16 %v171, %v170
    %v184 = vpack.c.b16 %v173, %v172
    %v185 = vpack.c.b16 %v175, %v174
    %v186 = vpack.c.b16 %v177, %v176
    %v187 = vpack.c.b16 %v179, %v178
    %196 = vmatprep.subr.bf16.mxu0 0
    %197 = vmatpush1.bf16.msra.mxu0 %v180
    %198 = vmatprep.subr.bf16.mxu0 0
    %199 = vmatpush1.bf16.msra.mxu0 %v181
    %200 = vmatprep.subr.bf16.mxu0 0
    %201 = vmatpush1.bf16.msra.mxu0 %v182
    %202 = vmatprep.subr.bf16.mxu0 0
    %203 = vmatpush1.bf16.msra.mxu0 %v183
    %204 = vmatprep.subr.bf16.mxu0 0
    %205 = vmatpush1.bf16.msra.mxu0 %v184
    %206 = vmatprep.subr.bf16.mxu0 0
    %207 = vmatpush1.bf16.msra.mxu0 %v185
    %208 = vmatprep.subr.bf16.mxu0 0
    %209 = vmatpush1.bf16.msra.mxu0 %v186
    %210 = vmatprep.subr.bf16.mxu0 0
    %211 = vmatpush1.bf16.msra.mxu0 %v187
    %212 = vmatprep.subr.bf16.mxu0 0
    %213 = vmatpush1.bf16.msra.mxu0 0
    %214 = vmatprep.subr.bf16.mxu0 0
    %215 = vmatpush1.bf16.msra.mxu0 0
    %216 = vmatprep.subr.bf16.mxu0 0
    %217 = vmatpush1.bf16.msra.mxu0 0
    %218 = vmatprep.subr.bf16.mxu0 0
    %219 = vmatpush1.bf16.msra.mxu0 0
    %220 = vmatprep.subr.bf16.mxu0 0
    %221 = vmatpush1.bf16.msra.mxu0 0
    %222 = vmatprep.subr.bf16.mxu0 0
    %223 = vmatpush1.bf16.msra.mxu0 0
    %224 = vmatprep.subr.bf16.mxu0 0
    %225 = vmatpush1.bf16.msra.mxu0 0
    %226 = vmatprep.subr.bf16.mxu0 0
    %227 = vmatpush1.bf16.msra.mxu0 0
    %228 = vmatprep.mubr.bf16.mxu0 0
    %229 = vmatmul.mubr.bf16.gmra.mrb[0].mxu0 %v100
    %v230 = vpop.f32.mrb[0].mxu0
    %v231 = vadd.f32 %v146, %v230
    %v232 = vpop.f32.mrb[0].mxu0
    %v233 = vpop.f32.mrb[0].mxu0
    %v234 = vadd.f32 %v146, %v233
    %v235 = vpop.f32.mrb[0].mxu0
    %236 = vmatprep.mubr.bf16.mxu0 0
    %237 = vmatmul.mubr.bf16.gmra.mrb[0].mxu0 %v101
    %v238 = vpop.f32.mrb[0].mxu0
    %v239 = vadd.f32 %v146, %v238
    %v240 = vpop.f32.mrb[0].mxu0
    %v241 = vpop.f32.mrb[0].mxu0
    %v242 = vadd.f32 %v146, %v241
    %v243 = vpop.f32.mrb[0].mxu0
    %244 = vmatprep.mubr.bf16.mxu0 0
    %245 = vmatmul.mubr.bf16.gmra.mrb[0].mxu0 %v102
    %v246 = vpop.f32.mrb[0].mxu0
    %v247 = vadd.f32 %v146, %v246
    %v248 = vpop.f32.mrb[0].mxu0
    %v249 = vpop.f32.mrb[0].mxu0
    %v250 = vadd.f32 %v146, %v249
    %v251 = vpop.f32.mrb[0].mxu0
    %252 = vmatprep.mubr.bf16.mxu0 0
    %253 = vmatmul.mubr.bf16.gmra.mrb[0].mxu0 %v103
    %v254 = vpop.f32.mrb[0].mxu0
    %v255 = vadd.f32 %v146, %v254
    %v256 = vpop.f32.mrb[0].mxu0
    %v257 = vpop.f32.mrb[0].mxu0
    %v258 = vadd.f32 %v146, %v257
    %v259 = vpop.f32.mrb[0].mxu0
    %260 = vmatprep.mubr.bf16.mxu0 0
    %261 = vmatmul.mubr.bf16.gmra.mrb[0].mxu0 %v104
    %v262 = vpop.f32.mrb[0].mxu0
    %v263 = vadd.f32 %v146, %v262
    %v264 = vpop.f32.mrb[0].mxu0
    %v265 = vpop.f32.mrb[0].mxu0
    %v266 = vadd.f32 %v146, %v265
    %v267 = vpop.f32.mrb[0].mxu0
    %268 = vmatprep.mubr.bf16.mxu0 0
    %269 = vmatmul.mubr.bf16.gmra.mrb[0].mxu0 %v105
    %v270 = vpop.f32.mrb[0].mxu0
    %v271 = vadd.f32 %v146, %v270
    %v272 = vpop.f32.mrb[0].mxu0
    %v273 = vpop.f32.mrb[0].mxu0
    %v274 = vadd.f32 %v146, %v273
    %v275 = vpop.f32.mrb[0].mxu0
    %276 = vmatprep.mubr.bf16.mxu0 0
    %277 = vmatmul.mubr.bf16.gmra.mrb[0].mxu0 %v106
    %v278 = vpop.f32.mrb[0].mxu0
    %v279 = vadd.f32 %v146, %v278
    %v280 = vpop.f32.mrb[0].mxu0
    %v281 = vpop.f32.mrb[0].mxu0
    %v282 = vadd.f32 %v146, %v281
    %v283 = vpop.f32.mrb[0].mxu0
    %284 = vmatprep.mubr.bf16.mxu0 0
    %285 = vmatmul.mubr.bf16.gmra.mrb[0].mxu0 %v107
    %v286 = vpop.f32.mrb[0].mxu0
    %v287 = vadd.f32 %v146, %v286
    %v288 = vpop.f32.mrb[0].mxu0
    %v289 = vpop.f32.mrb[0].mxu0
    %v290 = vadd.f32 %v146, %v289
    %v291 = vpop.f32.mrb[0].mxu0
    %292 = vmatprep.mubr.bf16.mxu0 0
    %293 = vmatmul.mubr.bf16.gmra.mrb[0].mxu0 %v108
    %v294 = vpop.f32.mrb[0].mxu0
    %v295 = vadd.f32 %v146, %v294
    %v296 = vpop.f32.mrb[0].mxu0
    %v297 = vpop.f32.mrb[0].mxu0
    %v298 = vadd.f32 %v146, %v297
    %v299 = vpop.f32.mrb[0].mxu0
    %300 = vmatprep.mubr.bf16.mxu0 0
    %301 = vmatmul.mubr.bf16.gmra.mrb[0].mxu0 %v109
    %v302 = vpop.f32.mrb[0].mxu0
    %v303 = vadd.f32 %v146, %v302
    %v304 = vpop.f32.mrb[0].mxu0
    %v305 = vpop.f32.mrb[0].mxu0
    %v306 = vadd.f32 %v146, %v305
    %v307 = vpop.f32.mrb[0].mxu0
    %308 = vmatprep.mubr.bf16.mxu0 0
    %309 = vmatmul.mubr.bf16.gmra.mrb[0].mxu0 %v110
    %v310 = vpop.f32.mrb[0].mxu0
    %v311 = vadd.f32 %v146, %v310
    %v312 = vpop.f32.mrb[0].mxu0
    %v313 = vpop.f32.mrb[0].mxu0
    %v314 = vadd.f32 %v146, %v313
    %v315 = vpop.f32.mrb[0].mxu0
    %316 = vmatprep.mubr.bf16.mxu0 0
    %317 = vmatmul.mubr.bf16.gmra.mrb[0].mxu0 %v111
    %v318 = vpop.f32.mrb[0].mxu0
    %v319 = vadd.f32 %v146, %v318
    %v320 = vpop.f32.mrb[0].mxu0
    %v321 = vpop.f32.mrb[0].mxu0
    %v322 = vadd.f32 %v146, %v321
    %v323 = vpop.f32.mrb[0].mxu0
    %324 = vmatprep.mubr.bf16.mxu0 0
    %325 = vmatmul.mubr.bf16.gmra.mrb[0].mxu0 %v112
    %v326 = vpop.f32.mrb[0].mxu0
    %v327 = vadd.f32 %v146, %v326
    %v328 = vpop.f32.mrb[0].mxu0
    %v329 = vpop.f32.mrb[0].mxu0
    %v330 = vadd.f32 %v146, %v329
    %v331 = vpop.f32.mrb[0].mxu0
    %332 = vmatprep.mubr.bf16.mxu0 0
    %333 = vmatmul.mubr.bf16.gmra.mrb[0].mxu0 %v113
    %v334 = vpop.f32.mrb[0].mxu0
    %v335 = vadd.f32 %v146, %v334
    %v336 = vpop.f32.mrb[0].mxu0
    %v337 = vpop.f32.mrb[0].mxu0
    %v338 = vadd.f32 %v146, %v337
    %v339 = vpop.f32.mrb[0].mxu0
    %340 = vmatprep.mubr.bf16.mxu0 0
    %341 = vmatmul.mubr.bf16.gmra.mrb[0].mxu0 %v114
    %v342 = vpop.f32.mrb[0].mxu0
    %v343 = vadd.f32 %v146, %v342
    %v344 = vpop.f32.mrb[0].mxu0
    %v345 = vpop.f32.mrb[0].mxu0
    %v346 = vadd.f32 %v146, %v345
    %v347 = vpop.f32.mrb[0].mxu0
    %348 = vmatprep.mubr.bf16.mxu0 0
    %349 = vmatmul.mubr.bf16.gmra.mrb[0].mxu0 %v115
    %v350 = vpop.f32.mrb[0].mxu0
    %v351 = vadd.f32 %v146, %v350
    %v352 = vpop.f32.mrb[0].mxu0
    %v353 = vpop.f32.mrb[0].mxu0
    %v354 = vadd.f32 %v146, %v353
    %v355 = vpop.f32.mrb[0].mxu0
    %356 = vmatprep.mubr.bf16.mxu0 0
    %357 = vmatmul.mubr.bf16.gmra.mrb[0].mxu0 %v116
    %v358 = vpop.f32.mrb[0].mxu0
    %v359 = vadd.f32 %v146, %v358
    %v360 = vpop.f32.mrb[0].mxu0
    %v361 = vpop.f32.mrb[0].mxu0
    %v362 = vadd.f32 %v146, %v361
    %v363 = vpop.f32.mrb[0].mxu0
    %364 = vmatprep.mubr.bf16.mxu0 0
    %365 = vmatmul.mubr.bf16.gmra.mrb[0].mxu0 %v117
    %v366 = vpop.f32.mrb[0].mxu0
    %v367 = vadd.f32 %v146, %v366
    %v368 = vpop.f32.mrb[0].mxu0
    %v369 = vpop.f32.mrb[0].mxu0
    %v370 = vadd.f32 %v146, %v369
    %v371 = vpop.f32.mrb[0].mxu0
    %372 = vmatprep.mubr.bf16.mxu0 0
    %373 = vmatmul.mubr.bf16.gmra.mrb[0].mxu0 %v118
    %v374 = vpop.f32.mrb[0].mxu0
    %v375 = vadd.f32 %v146, %v374
    %v376 = vpop.f32.mrb[0].mxu0
    %v377 = vpop.f32.mrb[0].mxu0
    %v378 = vadd.f32 %v146, %v377
    %v379 = vpop.f32.mrb[0].mxu0
    %380 = vmatprep.mubr.bf16.mxu0 0
    %381 = vmatmul.mubr.bf16.gmra.mrb[0].mxu0 %v119
    %v382 = vpop.f32.mrb[0].mxu0
    %v383 = vadd.f32 %v146, %v382
    %v384 = vpop.f32.mrb[0].mxu0
    %v385 = vpop.f32.mrb[0].mxu0
    %v386 = vadd.f32 %v146, %v385
    %v387 = vpop.f32.mrb[0].mxu0
    %388 = vmatprep.mubr.bf16.mxu0 0
    %389 = vmatmul.mubr.bf16.gmra.mrb[0].mxu0 %v120
    %v390 = vpop.f32.mrb[0].mxu0
    %v391 = vadd.f32 %v146, %v390
    %v392 = vpop.f32.mrb[0].mxu0
    %v393 = vpop.f32.mrb[0].mxu0
    %v394 = vadd.f32 %v146, %v393
    %v395 = vpop.f32.mrb[0].mxu0
    %396 = vmatprep.mubr.bf16.mxu0 0
    %397 = vmatmul.mubr.bf16.gmra.mrb[0].mxu0 %v121
    %v398 = vpop.f32.mrb[0].mxu0
    %v399 = vadd.f32 %v146, %v398
    %v400 = vpop.f32.mrb[0].mxu0
    %v401 = vpop.f32.mrb[0].mxu0
    %v402 = vadd.f32 %v146, %v401
    %v403 = vpop.f32.mrb[0].mxu0
    %404 = vmatprep.mubr.bf16.mxu0 0
    %405 = vmatmul.mubr.bf16.gmra.mrb[0].mxu0 %v122
    %v406 = vpop.f32.mrb[0].mxu0
    %v407 = vadd.f32 %v146, %v406
    %v408 = vpop.f32.mrb[0].mxu0
    %v409 = vpop.f32.mrb[0].mxu0
    %v410 = vadd.f32 %v146, %v409
    %v411 = vpop.f32.mrb[0].mxu0
    %412 = vmatprep.mubr.bf16.mxu0 0
    %413 = vmatmul.mubr.bf16.gmra.mrb[0].mxu0 %v123
    %v414 = vpop.f32.mrb[0].mxu0
    %v415 = vadd.f32 %v146, %v414
    %v416 = vpop.f32.mrb[0].mxu0
    %v417 = vpop.f32.mrb[0].mxu0
    %v418 = vadd.f32 %v146, %v417
    %v419 = vpop.f32.mrb[0].mxu0
    %420 = vmatprep.mubr.bf16.mxu0 0
    %421 = vmatmul.mubr.bf16.gmra.mrb[0].mxu0 %v124
    %v422 = vpop.f32.mrb[0].mxu0
    %v423 = vadd.f32 %v146, %v422
    %v424 = vpop.f32.mrb[0].mxu0
    %v425 = vpop.f32.mrb[0].mxu0
    %v426 = vadd.f32 %v146, %v425
    %v427 = vpop.f32.mrb[0].mxu0
    %428 = vdwg.mxu0
    %429 = vadd.xlane.f32.xlu0 %v231
    %v430 = vpop.xlane.xlu0 %429
    %431 = vadd.xlane.f32.xlu0 %v234
    %v432 = vpop.xlane.xlu0 %431
    %433 = vadd.xlane.f32.xlu0 %v239
    %v434 = vpop.xlane.xlu0 %433
    %435 = vadd.xlane.f32.xlu0 %v242
    %v436 = vpop.xlane.xlu0 %435
    %437 = vadd.xlane.f32.xlu0 %v247
    %v438 = vpop.xlane.xlu0 %437
    %439 = vadd.xlane.f32.xlu0 %v250
    %v440 = vpop.xlane.xlu0 %439
    %441 = vadd.xlane.f32.xlu0 %v255
    %v442 = vpop.xlane.xlu0 %441
    %443 = vadd.xlane.f32.xlu0 %v258
    %v444 = vpop.xlane.xlu0 %443
    %445 = vadd.xlane.f32.xlu0 %v263
    %v446 = vpop.xlane.xlu0 %445
    %447 = vadd.xlane.f32.xlu0 %v266
    %v448 = vpop.xlane.xlu0 %447
    %449 = vadd.xlane.f32.xlu0 %v271
    %v450 = vpop.xlane.xlu0 %449
    %451 = vadd.xlane.f32.xlu0 %v274
    %v452 = vpop.xlane.xlu0 %451
    %453 = vadd.xlane.f32.xlu0 %v279
    %v454 = vpop.xlane.xlu0 %453
    %455 = vadd.xlane.f32.xlu0 %v282
    %v456 = vpop.xlane.xlu0 %455
    %457 = vadd.xlane.f32.xlu0 %v287
    %v458 = vpop.xlane.xlu0 %457
    %459 = vadd.xlane.f32.xlu0 %v290
    %v460 = vpop.xlane.xlu0 %459
    %461 = vadd.xlane.f32.xlu0 %v295
    %v462 = vpop.xlane.xlu0 %461
    %463 = vadd.xlane.f32.xlu0 %v298
    %v464 = vpop.xlane.xlu0 %463
    %465 = vadd.xlane.f32.xlu0 %v303
    %v466 = vpop.xlane.xlu0 %465
    %467 = vadd.xlane.f32.xlu0 %v306
    %v468 = vpop.xlane.xlu0 %467
    %469 = vadd.xlane.f32.xlu0 %v311
    %v470 = vpop.xlane.xlu0 %469
    %471 = vadd.xlane.f32.xlu0 %v314
    %v472 = vpop.xlane.xlu0 %471
    %473 = vadd.xlane.f32.xlu0 %v319
    %v474 = vpop.xlane.xlu0 %473
    %475 = vadd.xlane.f32.xlu0 %v322
    %v476 = vpop.xlane.xlu0 %475
    %477 = vadd.xlane.f32.xlu0 %v327
    %v478 = vpop.xlane.xlu0 %477
    %479 = vadd.xlane.f32.xlu0 %v330
    %v480 = vpop.xlane.xlu0 %479
    %481 = vadd.xlane.f32.xlu0 %v335
    %v482 = vpop.xlane.xlu0 %481
    %483 = vadd.xlane.f32.xlu0 %v338
    %v484 = vpop.xlane.xlu0 %483
    %485 = vadd.xlane.f32.xlu0 %v343
    %v486 = vpop.xlane.xlu0 %485
    %487 = vadd.xlane.f32.xlu0 %v346
    %v488 = vpop.xlane.xlu0 %487
    %489 = vadd.xlane.f32.xlu0 %v351
    %v490 = vpop.xlane.xlu0 %489
    %491 = vadd.xlane.f32.xlu0 %v354
    %v492 = vpop.xlane.xlu0 %491
    %493 = vadd.xlane.f32.xlu0 %v359
    %v494 = vpop.xlane.xlu0 %493
    %495 = vadd.xlane.f32.xlu0 %v362
    %v496 = vpop.xlane.xlu0 %495
    %497 = vadd.xlane.f32.xlu0 %v367
    %v498 = vpop.xlane.xlu0 %497
    %499 = vadd.xlane.f32.xlu0 %v370
    %v500 = vpop.xlane.xlu0 %499
    %501 = vadd.xlane.f32.xlu0 %v375
    %v502 = vpop.xlane.xlu0 %501
    %503 = vadd.xlane.f32.xlu0 %v378
    %v504 = vpop.xlane.xlu0 %503
    %505 = vadd.xlane.f32.xlu0 %v383
    %v506 = vpop.xlane.xlu0 %505
    %507 = vadd.xlane.f32.xlu0 %v386
    %v508 = vpop.xlane.xlu0 %507
    %509 = vadd.xlane.f32.xlu0 %v391
    %v510 = vpop.xlane.xlu0 %509
    %511 = vadd.xlane.f32.xlu0 %v394
    %v512 = vpop.xlane.xlu0 %511
    %513 = vadd.xlane.f32.xlu0 %v399
    %v514 = vpop.xlane.xlu0 %513
    %515 = vadd.xlane.f32.xlu0 %v402
    %v516 = vpop.xlane.xlu0 %515
    %517 = vadd.xlane.f32.xlu0 %v407
    %v518 = vpop.xlane.xlu0 %517
    %519 = vadd.xlane.f32.xlu0 %v410
    %v520 = vpop.xlane.xlu0 %519
    %521 = vadd.xlane.f32.xlu0 %v415
    %v522 = vpop.xlane.xlu0 %521
    %523 = vadd.xlane.f32.xlu0 %v418
    %v524 = vpop.xlane.xlu0 %523
    %525 = vadd.xlane.f32.xlu0 %v423
    %v526 = vpop.xlane.xlu0 %525
    %527 = vadd.xlane.f32.xlu0 %v426
    %v528 = vpop.xlane.xlu0 %527
    %v529 = vrcp.pop 128.0
    %v530 = vmul.f32 %v430, %v529
    %v531 = vmul.f32 %v432, %v529
    %v532 = vmul.f32 %v434, %v529
    %v533 = vmul.f32 %v436, %v529
    %v534 = vmul.f32 %v438, %v529
    %v535 = vmul.f32 %v440, %v529
    %v536 = vmul.f32 %v442, %v529
    %v537 = vmul.f32 %v444, %v529
    %v538 = vmul.f32 %v446, %v529
    %v539 = vmul.f32 %v448, %v529
    %v540 = vmul.f32 %v450, %v529
    %v541 = vmul.f32 %v452, %v529
    %v542 = vmul.f32 %v454, %v529
    %v543 = vmul.f32 %v456, %v529
    %v544 = vmul.f32 %v458, %v529
    %v545 = vmul.f32 %v460, %v529
    %v546 = vmul.f32 %v462, %v529
    %v547 = vmul.f32 %v464, %v529
    %v548 = vmul.f32 %v466, %v529
    %v549 = vmul.f32 %v468, %v529
    %v550 = vmul.f32 %v470, %v529
    %v551 = vmul.f32 %v472, %v529
    %v552 = vmul.f32 %v474, %v529
    %v553 = vmul.f32 %v476, %v529
    %v554 = vmul.f32 %v478, %v529
    %v555 = vmul.f32 %v480, %v529
    %v556 = vmul.f32 %v482, %v529
    %v557 = vmul.f32 %v484, %v529
    %v558 = vmul.f32 %v486, %v529
    %v559 = vmul.f32 %v488, %v529
    %v560 = vmul.f32 %v490, %v529
    %v561 = vmul.f32 %v492, %v529
    %v562 = vmul.f32 %v494, %v529
    %v563 = vmul.f32 %v496, %v529
    %v564 = vmul.f32 %v498, %v529
    %v565 = vmul.f32 %v500, %v529
    %v566 = vmul.f32 %v502, %v529
    %v567 = vmul.f32 %v504, %v529
    %v568 = vmul.f32 %v506, %v529
    %v569 = vmul.f32 %v508, %v529
    %v570 = vmul.f32 %v510, %v529
    %v571 = vmul.f32 %v512, %v529
    %v572 = vmul.f32 %v514, %v529
    %v573 = vmul.f32 %v516, %v529
    %v574 = vmul.f32 %v518, %v529
    %v575 = vmul.f32 %v520, %v529
    %v576 = vmul.f32 %v522, %v529
    %v577 = vmul.f32 %v524, %v529
    %v578 = vmul.f32 %v526, %v529
    %v579 = vmul.f32 %v528, %v529
    %v580 = vsub.f32 %v231, %v530
    %v581 = vsub.f32 %v234, %v531
    %v582 = vsub.f32 %v239, %v532
    %v583 = vsub.f32 %v242, %v533
    %v584 = vsub.f32 %v247, %v534
    %v585 = vsub.f32 %v250, %v535
    %v586 = vsub.f32 %v255, %v536
    %v587 = vsub.f32 %v258, %v537
    %v588 = vsub.f32 %v263, %v538
    %v589 = vsub.f32 %v266, %v539
    %v590 = vsub.f32 %v271, %v540
    %v591 = vsub.f32 %v274, %v541
    %v592 = vsub.f32 %v279, %v542
    %v593 = vsub.f32 %v282, %v543
    %v594 = vsub.f32 %v287, %v544
    %v595 = vsub.f32 %v290, %v545
    %v596 = vsub.f32 %v295, %v546
    %v597 = vsub.f32 %v298, %v547
    %v598 = vsub.f32 %v303, %v548
    %v599 = vsub.f32 %v306, %v549
    %v600 = vsub.f32 %v311, %v550
    %v601 = vsub.f32 %v314, %v551
    %v602 = vsub.f32 %v319, %v552
    %v603 = vsub.f32 %v322, %v553
    %v604 = vsub.f32 %v327, %v554
    %v605 = vsub.f32 %v330, %v555
    %v606 = vsub.f32 %v335, %v556
    %v607 = vsub.f32 %v338, %v557
    %v608 = vsub.f32 %v343, %v558
    %v609 = vsub.f32 %v346, %v559
    %v610 = vsub.f32 %v351, %v560
    %v611 = vsub.f32 %v354, %v561
    %v612 = vsub.f32 %v359, %v562
    %v613 = vsub.f32 %v362, %v563
    %v614 = vsub.f32 %v367, %v564
    %v615 = vsub.f32 %v370, %v565
    %v616 = vsub.f32 %v375, %v566
    %v617 = vsub.f32 %v378, %v567
    %v618 = vsub.f32 %v383, %v568
    %v619 = vsub.f32 %v386, %v569
    %v620 = vsub.f32 %v391, %v570
    %v621 = vsub.f32 %v394, %v571
    %v622 = vsub.f32 %v399, %v572
    %v623 = vsub.f32 %v402, %v573
    %v624 = vsub.f32 %v407, %v574
    %v625 = vsub.f32 %v410, %v575
    %v626 = vsub.f32 %v415, %v576
    %v627 = vsub.f32 %v418, %v577
    %v628 = vsub.f32 %v423, %v578
    %v629 = vsub.f32 %v426, %v579
    %v630 = vmul.f32 %v580, %v580
    %v631 = vmul.f32 %v581, %v581
    %v632 = vmul.f32 %v582, %v582
    %v633 = vmul.f32 %v583, %v583
    %v634 = vmul.f32 %v584, %v584
    %v635 = vmul.f32 %v585, %v585
    %v636 = vmul.f32 %v586, %v586
    %v637 = vmul.f32 %v587, %v587
    %v638 = vmul.f32 %v588, %v588
    %v639 = vmul.f32 %v589, %v589
    %v640 = vmul.f32 %v590, %v590
    %v641 = vmul.f32 %v591, %v591
    %v642 = vmul.f32 %v592, %v592
    %v643 = vmul.f32 %v593, %v593
    %v644 = vmul.f32 %v594, %v594
    %v645 = vmul.f32 %v595, %v595
    %v646 = vmul.f32 %v596, %v596
    %v647 = vmul.f32 %v597, %v597
    %v648 = vmul.f32 %v598, %v598
    %v649 = vmul.f32 %v599, %v599
    %v650 = vmul.f32 %v600, %v600
    %v651 = vmul.f32 %v601, %v601
    %v652 = vmul.f32 %v602, %v602
    %v653 = vmul.f32 %v603, %v603
    %v654 = vmul.f32 %v604, %v604
    %v655 = vmul.f32 %v605, %v605
    %v656 = vmul.f32 %v606, %v606
    %v657 = vmul.f32 %v607, %v607
    %v658 = vmul.f32 %v608, %v608
    %v659 = vmul.f32 %v609, %v609
    %v660 = vmul.f32 %v610, %v610
    %v661 = vmul.f32 %v611, %v611
    %v662 = vmul.f32 %v612, %v612
    %v663 = vmul.f32 %v613, %v613
    %v664 = vmul.f32 %v614, %v614
    %v665 = vmul.f32 %v615, %v615
    %v666 = vmul.f32 %v616, %v616
    %v667 = vmul.f32 %v617, %v617
    %v668 = vmul.f32 %v618, %v618
    %v669 = vmul.f32 %v619, %v619
    %v670 = vmul.f32 %v620, %v620
    %v671 = vmul.f32 %v621, %v621
    %v672 = vmul.f32 %v622, %v622
    %v673 = vmul.f32 %v623, %v623
    %v674 = vmul.f32 %v624, %v624
    %v675 = vmul.f32 %v625, %v625
    %v676 = vmul.f32 %v626, %v626
    %v677 = vmul.f32 %v627, %v627
    %v678 = vmul.f32 %v628, %v628
    %v679 = vmul.f32 %v629, %v629
    %680 = vadd.xlane.f32.xlu0 %v630
    %v681 = vpop.xlane.xlu0 %680
    %682 = vadd.xlane.f32.xlu0 %v631
    %v683 = vpop.xlane.xlu0 %682
    %684 = vadd.xlane.f32.xlu0 %v632
    %v685 = vpop.xlane.xlu0 %684
    %686 = vadd.xlane.f32.xlu0 %v633
    %v687 = vpop.xlane.xlu0 %686
    %688 = vadd.xlane.f32.xlu0 %v634
    %v689 = vpop.xlane.xlu0 %688
    %690 = vadd.xlane.f32.xlu0 %v635
    %v691 = vpop.xlane.xlu0 %690
    %692 = vadd.xlane.f32.xlu0 %v636
    %v693 = vpop.xlane.xlu0 %692
    %694 = vadd.xlane.f32.xlu0 %v637
    %v695 = vpop.xlane.xlu0 %694
    %696 = vadd.xlane.f32.xlu0 %v638
    %v697 = vpop.xlane.xlu0 %696
    %698 = vadd.xlane.f32.xlu0 %v639
    %v699 = vpop.xlane.xlu0 %698
    %700 = vadd.xlane.f32.xlu0 %v640
    %v701 = vpop.xlane.xlu0 %700
    %702 = vadd.xlane.f32.xlu0 %v641
    %v703 = vpop.xlane.xlu0 %702
    %704 = vadd.xlane.f32.xlu0 %v642
    %v705 = vpop.xlane.xlu0 %704
    %706 = vadd.xlane.f32.xlu0 %v643
    %v707 = vpop.xlane.xlu0 %706
    %708 = vadd.xlane.f32.xlu0 %v644
    %v709 = vpop.xlane.xlu0 %708
    %710 = vadd.xlane.f32.xlu0 %v645
    %v711 = vpop.xlane.xlu0 %710
    %712 = vadd.xlane.f32.xlu0 %v646
    %v713 = vpop.xlane.xlu0 %712
    %714 = vadd.xlane.f32.xlu0 %v647
    %v715 = vpop.xlane.xlu0 %714
    %716 = vadd.xlane.f32.xlu0 %v648
    %v717 = vpop.xlane.xlu0 %716
    %718 = vadd.xlane.f32.xlu0 %v649
    %v719 = vpop.xlane.xlu0 %718
    %720 = vadd.xlane.f32.xlu0 %v650
    %v721 = vpop.xlane.xlu0 %720
    %722 = vadd.xlane.f32.xlu0 %v651
    %v723 = vpop.xlane.xlu0 %722
    %724 = vadd.xlane.f32.xlu0 %v652
    %v725 = vpop.xlane.xlu0 %724
    %726 = vadd.xlane.f32.xlu0 %v653
    %v727 = vpop.xlane.xlu0 %726
    %728 = vadd.xlane.f32.xlu0 %v654
    %v729 = vpop.xlane.xlu0 %728
    %730 = vadd.xlane.f32.xlu0 %v655
    %v731 = vpop.xlane.xlu0 %730
    %732 = vadd.xlane.f32.xlu0 %v656
    %v733 = vpop.xlane.xlu0 %732
    %734 = vadd.xlane.f32.xlu0 %v657
    %v735 = vpop.xlane.xlu0 %734
    %736 = vadd.xlane.f32.xlu0 %v658
    %v737 = vpop.xlane.xlu0 %736
    %738 = vadd.xlane.f32.xlu0 %v659
    %v739 = vpop.xlane.xlu0 %738
    %740 = vadd.xlane.f32.xlu0 %v660
    %v741 = vpop.xlane.xlu0 %740
    %742 = vadd.xlane.f32.xlu0 %v661
    %v743 = vpop.xlane.xlu0 %742
    %744 = vadd.xlane.f32.xlu0 %v662
    %v745 = vpop.xlane.xlu0 %744
    %746 = vadd.xlane.f32.xlu0 %v663
    %v747 = vpop.xlane.xlu0 %746
    %748 = vadd.xlane.f32.xlu0 %v664
    %v749 = vpop.xlane.xlu0 %748
    %750 = vadd.xlane.f32.xlu0 %v665
    %v751 = vpop.xlane.xlu0 %750
    %752 = vadd.xlane.f32.xlu0 %v666
    %v753 = vpop.xlane.xlu0 %752
    %754 = vadd.xlane.f32.xlu0 %v667
    %v755 = vpop.xlane.xlu0 %754
    %756 = vadd.xlane.f32.xlu0 %v668
    %v757 = vpop.xlane.xlu0 %756
    %758 = vadd.xlane.f32.xlu0 %v669
    %v759 = vpop.xlane.xlu0 %758
    %760 = vadd.xlane.f32.xlu0 %v670
    %v761 = vpop.xlane.xlu0 %760
    %762 = vadd.xlane.f32.xlu0 %v671
    %v763 = vpop.xlane.xlu0 %762
    %764 = vadd.xlane.f32.xlu0 %v672
    %v765 = vpop.xlane.xlu0 %764
    %766 = vadd.xlane.f32.xlu0 %v673
    %v767 = vpop.xlane.xlu0 %766
    %768 = vadd.xlane.f32.xlu0 %v674
    %v769 = vpop.xlane.xlu0 %768
    %770 = vadd.xlane.f32.xlu0 %v675
    %v771 = vpop.xlane.xlu0 %770
    %772 = vadd.xlane.f32.xlu0 %v676
    %v773 = vpop.xlane.xlu0 %772
    %774 = vadd.xlane.f32.xlu0 %v677
    %v775 = vpop.xlane.xlu0 %774
    %776 = vadd.xlane.f32.xlu0 %v678
    %v777 = vpop.xlane.xlu0 %776
    %778 = vadd.xlane.f32.xlu0 %v679
    %v779 = vpop.xlane.xlu0 %778
    %v780 = vmul.f32 %v681, %v529
    %v781 = vmul.f32 %v683, %v529
    %v782 = vmul.f32 %v685, %v529
    %v783 = vmul.f32 %v687, %v529
    %v784 = vmul.f32 %v689, %v529
    %v785 = vmul.f32 %v691, %v529
    %v786 = vmul.f32 %v693, %v529
    %v787 = vmul.f32 %v695, %v529
    %v788 = vmul.f32 %v697, %v529
    %v789 = vmul.f32 %v699, %v529
    %v790 = vmul.f32 %v701, %v529
    %v791 = vmul.f32 %v703, %v529
    %v792 = vmul.f32 %v705, %v529
    %v793 = vmul.f32 %v707, %v529
    %v794 = vmul.f32 %v709, %v529
    %v795 = vmul.f32 %v711, %v529
    %v796 = vmul.f32 %v713, %v529
    %v797 = vmul.f32 %v715, %v529
    %v798 = vmul.f32 %v717, %v529
    %v799 = vmul.f32 %v719, %v529
    %v800 = vmul.f32 %v721, %v529
    %v801 = vmul.f32 %v723, %v529
    %v802 = vmul.f32 %v725, %v529
    %v803 = vmul.f32 %v727, %v529
    %v804 = vmul.f32 %v729, %v529
    %v805 = vmul.f32 %v731, %v529
    %v806 = vmul.f32 %v733, %v529
    %v807 = vmul.f32 %v735, %v529
    %v808 = vmul.f32 %v737, %v529
    %v809 = vmul.f32 %v739, %v529
    %v810 = vmul.f32 %v741, %v529
    %v811 = vmul.f32 %v743, %v529
    %v812 = vmul.f32 %v745, %v529
    %v813 = vmul.f32 %v747, %v529
    %v814 = vmul.f32 %v749, %v529
    %v815 = vmul.f32 %v751, %v529
    %v816 = vmul.f32 %v753, %v529
    %v817 = vmul.f32 %v755, %v529
    %v818 = vmul.f32 %v757, %v529
    %v819 = vmul.f32 %v759, %v529
    %v820 = vmul.f32 %v761, %v529
    %v821 = vmul.f32 %v763, %v529
    %v822 = vmul.f32 %v765, %v529
    %v823 = vmul.f32 %v767, %v529
    %v824 = vmul.f32 %v769, %v529
    %v825 = vmul.f32 %v771, %v529
    %v826 = vmul.f32 %v773, %v529
    %v827 = vmul.f32 %v775, %v529
    %v828 = vmul.f32 %v777, %v529
    %v829 = vmul.f32 %v779, %v529
    %v830 = vadd.f32 %v780, 1e-05
    %v831 = vadd.f32 %v781, 1e-05
    %v832 = vadd.f32 %v782, 1e-05
    %v833 = vadd.f32 %v783, 1e-05
    %v834 = vadd.f32 %v784, 1e-05
    %v835 = vadd.f32 %v785, 1e-05
    %v836 = vadd.f32 %v786, 1e-05
    %v837 = vadd.f32 %v787, 1e-05
    %v838 = vadd.f32 %v788, 1e-05
    %v839 = vadd.f32 %v789, 1e-05
    %v840 = vadd.f32 %v790, 1e-05
    %v841 = vadd.f32 %v791, 1e-05
    %v842 = vadd.f32 %v792, 1e-05
    %v843 = vadd.f32 %v793, 1e-05
    %v844 = vadd.f32 %v794, 1e-05
    %v845 = vadd.f32 %v795, 1e-05
    %v846 = vadd.f32 %v796, 1e-05
    %v847 = vadd.f32 %v797, 1e-05
    %v848 = vadd.f32 %v798, 1e-05
    %v849 = vadd.f32 %v799, 1e-05
    %v850 = vadd.f32 %v800, 1e-05
    %v851 = vadd.f32 %v801, 1e-05
    %v852 = vadd.f32 %v802, 1e-05
    %v853 = vadd.f32 %v803, 1e-05
    %v854 = vadd.f32 %v804, 1e-05
    %v855 = vadd.f32 %v805, 1e-05
    %v856 = vadd.f32 %v806, 1e-05
    %v857 = vadd.f32 %v807, 1e-05
    %v858 = vadd.f32 %v808, 1e-05
    %v859 = vadd.f32 %v809, 1e-05
    %v860 = vadd.f32 %v810, 1e-05
    %v861 = vadd.f32 %v811, 1e-05
    %v862 = vadd.f32 %v812, 1e-05
    %v863 = vadd.f32 %v813, 1e-05
    %v864 = vadd.f32 %v814, 1e-05
    %v865 = vadd.f32 %v815, 1e-05
    %v866 = vadd.f32 %v816, 1e-05
    %v867 = vadd.f32 %v817, 1e-05
    %v868 = vadd.f32 %v818, 1e-05
    %v869 = vadd.f32 %v819, 1e-05
    %v870 = vadd.f32 %v820, 1e-05
    %v871 = vadd.f32 %v821, 1e-05
    %v872 = vadd.f32 %v822, 1e-05
    %v873 = vadd.f32 %v823, 1e-05
    %v874 = vadd.f32 %v824, 1e-05
    %v875 = vadd.f32 %v825, 1e-05
    %v876 = vadd.f32 %v826, 1e-05
    %v877 = vadd.f32 %v827, 1e-05
    %v878 = vadd.f32 %v828, 1e-05
    %v879 = vadd.f32 %v829, 1e-05
    %v880 = vrsqrt.pop %v830
    %v881 = vrsqrt.pop %v831
    %v882 = vrsqrt.pop %v832
    %v883 = vrsqrt.pop %v833
    %v884 = vrsqrt.pop %v834
    %v885 = vrsqrt.pop %v835
    %v886 = vrsqrt.pop %v836
    %v887 = vrsqrt.pop %v837
    %v888 = vrsqrt.pop %v838
    %v889 = vrsqrt.pop %v839
    %v890 = vrsqrt.pop %v840
    %v891 = vrsqrt.pop %v841
    %v892 = vrsqrt.pop %v842
    %v893 = vrsqrt.pop %v843
    %v894 = vrsqrt.pop %v844
    %v895 = vrsqrt.pop %v845
    %v896 = vrsqrt.pop %v846
    %v897 = vrsqrt.pop %v847
    %v898 = vrsqrt.pop %v848
    %v899 = vrsqrt.pop %v849
    %v900 = vrsqrt.pop %v850
    %v901 = vrsqrt.pop %v851
    %v902 = vrsqrt.pop %v852
    %v903 = vrsqrt.pop %v853
    %v904 = vrsqrt.pop %v854
    %v905 = vrsqrt.pop %v855
    %v906 = vrsqrt.pop %v856
    %v907 = vrsqrt.pop %v857
    %v908 = vrsqrt.pop %v858
    %v909 = vrsqrt.pop %v859
    %v910 = vrsqrt.pop %v860
    %v911 = vrsqrt.pop %v861
    %v912 = vrsqrt.pop %v862
    %v913 = vrsqrt.pop %v863
    %v914 = vrsqrt.pop %v864
    %v915 = vrsqrt.pop %v865
    %v916 = vrsqrt.pop %v866
    %v917 = vrsqrt.pop %v867
    %v918 = vrsqrt.pop %v868
    %v919 = vrsqrt.pop %v869
    %v920 = vrsqrt.pop %v870
    %v921 = vrsqrt.pop %v871
    %v922 = vrsqrt.pop %v872
    %v923 = vrsqrt.pop %v873
    %v924 = vrsqrt.pop %v874
    %v925 = vrsqrt.pop %v875
    %v926 = vrsqrt.pop %v876
    %v927 = vrsqrt.pop %v877
    %v928 = vrsqrt.pop %v878
    %v929 = vrsqrt.pop %v879
    %v930 = vmul.f32 %v580, %v880
    %v931 = vmul.f32 %v581, %v881
    %v932 = vmul.f32 %v582, %v882
    %v933 = vmul.f32 %v583, %v883
    %v934 = vmul.f32 %v584, %v884
    %v935 = vmul.f32 %v585, %v885
    %v936 = vmul.f32 %v586, %v886
    %v937 = vmul.f32 %v587, %v887
    %v938 = vmul.f32 %v588, %v888
    %v939 = vmul.f32 %v589, %v889
    %v940 = vmul.f32 %v590, %v890
    %v941 = vmul.f32 %v591, %v891
    %v942 = vmul.f32 %v592, %v892
    %v943 = vmul.f32 %v593, %v893
    %v944 = vmul.f32 %v594, %v894
    %v945 = vmul.f32 %v595, %v895
    %v946 = vmul.f32 %v596, %v896
    %v947 = vmul.f32 %v597, %v897
    %v948 = vmul.f32 %v598, %v898
    %v949 = vmul.f32 %v599, %v899
    %v950 = vmul.f32 %v600, %v900
    %v951 = vmul.f32 %v601, %v901
    %v952 = vmul.f32 %v602, %v902
    %v953 = vmul.f32 %v603, %v903
    %v954 = vmul.f32 %v604, %v904
    %v955 = vmul.f32 %v605, %v905
    %v956 = vmul.f32 %v606, %v906
    %v957 = vmul.f32 %v607, %v907
    %v958 = vmul.f32 %v608, %v908
    %v959 = vmul.f32 %v609, %v909
    %v960 = vmul.f32 %v610, %v910
    %v961 = vmul.f32 %v611, %v911
    %v962 = vmul.f32 %v612, %v912
    %v963 = vmul.f32 %v613, %v913
    %v964 = vmul.f32 %v614, %v914
    %v965 = vmul.f32 %v615, %v915
    %v966 = vmul.f32 %v616, %v916
    %v967 = vmul.f32 %v617, %v917
    %v968 = vmul.f32 %v618, %v918
    %v969 = vmul.f32 %v619, %v919
    %v970 = vmul.f32 %v620, %v920
    %v971 = vmul.f32 %v621, %v921
    %v972 = vmul.f32 %v622, %v922
    %v973 = vmul.f32 %v623, %v923
    %v974 = vmul.f32 %v624, %v924
    %v975 = vmul.f32 %v625, %v925
    %v976 = vmul.f32 %v626, %v926
    %v977 = vmul.f32 %v627, %v927
    %v978 = vmul.f32 %v628, %v928
    %v979 = vmul.f32 %v629, %v929
    %v980 = vld [vmem:[%s3] sm:$0x1]
    %v982 = vlaneseq
    %v983 = vshrl.u32 %v982, 7
    %v984 = vsub.s32 0, %v983
    %v985 = vrot.slane %v980, %v984
    %v987 = vmul.f32 %v930, %v985
    %v988 = vmul.f32 %v931, %v985
    %v989 = vmul.f32 %v932, %v985
    %v990 = vmul.f32 %v933, %v985
    %v991 = vmul.f32 %v934, %v985
    %v992 = vmul.f32 %v935, %v985
    %v993 = vmul.f32 %v936, %v985
    %v994 = vmul.f32 %v937, %v985
    %v995 = vmul.f32 %v938, %v985
    %v996 = vmul.f32 %v939, %v985
    %v997 = vmul.f32 %v940, %v985
    %v998 = vmul.f32 %v941, %v985
    %v999 = vmul.f32 %v942, %v985
    %v1000 = vmul.f32 %v943, %v985
    %v1001 = vmul.f32 %v944, %v985
    %v1002 = vmul.f32 %v945, %v985
    %v1003 = vmul.f32 %v946, %v985
    %v1004 = vmul.f32 %v947, %v985
    %v1005 = vmul.f32 %v948, %v985
    %v1006 = vmul.f32 %v949, %v985
    %v1007 = vmul.f32 %v950, %v985
    %v1008 = vmul.f32 %v951, %v985
    %v1009 = vmul.f32 %v952, %v985
    %v1010 = vmul.f32 %v953, %v985
    %v1011 = vmul.f32 %v954, %v985
    %v1012 = vmul.f32 %v955, %v985
    %v1013 = vmul.f32 %v956, %v985
    %v1014 = vmul.f32 %v957, %v985
    %v1015 = vmul.f32 %v958, %v985
    %v1016 = vmul.f32 %v959, %v985
    %v1017 = vmul.f32 %v960, %v985
    %v1018 = vmul.f32 %v961, %v985
    %v1019 = vmul.f32 %v962, %v985
    %v1020 = vmul.f32 %v963, %v985
    %v1021 = vmul.f32 %v964, %v985
    %v1022 = vmul.f32 %v965, %v985
    %v1023 = vmul.f32 %v966, %v985
    %v1024 = vmul.f32 %v967, %v985
    %v1025 = vmul.f32 %v968, %v985
    %v1026 = vmul.f32 %v969, %v985
    %v1027 = vmul.f32 %v970, %v985
    %v1028 = vmul.f32 %v971, %v985
    %v1029 = vmul.f32 %v972, %v985
    %v1030 = vmul.f32 %v973, %v985
    %v1031 = vmul.f32 %v974, %v985
    %v1032 = vmul.f32 %v975, %v985
    %v1033 = vmul.f32 %v976, %v985
    %v1034 = vmul.f32 %v977, %v985
    %v1035 = vmul.f32 %v978, %v985
    %v1036 = vmul.f32 %v979, %v985
    %v1037 = vld [vmem:[%s4] sm:$0x1]
    %v1039 = vlaneseq
    %v1040 = vshrl.u32 %v1039, 7
    %v1041 = vsub.s32 0, %v1040
    %v1042 = vrot.slane %v1037, %v1041
    %v1044 = vadd.f32 %v987, %v1042
    %v1045 = vadd.f32 %v988, %v1042
    %v1046 = vadd.f32 %v989, %v1042
    %v1047 = vadd.f32 %v990, %v1042
    %v1048 = vadd.f32 %v991, %v1042
    %v1049 = vadd.f32 %v992, %v1042
    %v1050 = vadd.f32 %v993, %v1042
    %v1051 = vadd.f32 %v994, %v1042
    %v1052 = vadd.f32 %v995, %v1042
    %v1053 = vadd.f32 %v996, %v1042
    %v1054 = vadd.f32 %v997, %v1042
    %v1055 = vadd.f32 %v998, %v1042
    %v1056 = vadd.f32 %v999, %v1042
    %v1057 = vadd.f32 %v1000, %v1042
    %v1058 = vadd.f32 %v1001, %v1042
    %v1059 = vadd.f32 %v1002, %v1042
    %v1060 = vadd.f32 %v1003, %v1042
    %v1061 = vadd.f32 %v1004, %v1042
    %v1062 = vadd.f32 %v1005, %v1042
    %v1063 = vadd.f32 %v1006, %v1042
    %v1064 = vadd.f32 %v1007, %v1042
    %v1065 = vadd.f32 %v1008, %v1042
    %v1066 = vadd.f32 %v1009, %v1042
    %v1067 = vadd.f32 %v1010, %v1042
    %v1068 = vadd.f32 %v1011, %v1042
    %v1069 = vadd.f32 %v1012, %v1042
    %v1070 = vadd.f32 %v1013, %v1042
    %v1071 = vadd.f32 %v1014, %v1042
    %v1072 = vadd.f32 %v1015, %v1042
    %v1073 = vadd.f32 %v1016, %v1042
    %v1074 = vadd.f32 %v1017, %v1042
    %v1075 = vadd.f32 %v1018, %v1042
    %v1076 = vadd.f32 %v1019, %v1042
    %v1077 = vadd.f32 %v1020, %v1042
    %v1078 = vadd.f32 %v1021, %v1042
    %v1079 = vadd.f32 %v1022, %v1042
    %v1080 = vadd.f32 %v1023, %v1042
    %v1081 = vadd.f32 %v1024, %v1042
    %v1082 = vadd.f32 %v1025, %v1042
    %v1083 = vadd.f32 %v1026, %v1042
    %v1084 = vadd.f32 %v1027, %v1042
    %v1085 = vadd.f32 %v1028, %v1042
    %v1086 = vadd.f32 %v1029, %v1042
    %v1087 = vadd.f32 %v1030, %v1042
    %v1088 = vadd.f32 %v1031, %v1042
    %v1089 = vadd.f32 %v1032, %v1042
    %v1090 = vadd.f32 %v1033, %v1042
    %v1091 = vadd.f32 %v1034, %v1042
    %v1092 = vadd.f32 %v1035, %v1042
    %v1093 = vadd.f32 %v1036, %v1042
    %v1094 = vadd.f32 %v1044, %v50
    %v1095 = vadd.f32 %v1045, %v51
    %v1096 = vadd.f32 %v1046, %v52
    %v1097 = vadd.f32 %v1047, %v53
    %v1098 = vadd.f32 %v1048, %v54
    %v1099 = vadd.f32 %v1049, %v55
    %v1100 = vadd.f32 %v1050, %v56
    %v1101 = vadd.f32 %v1051, %v57
    %v1102 = vadd.f32 %v1052, %v58
    %v1103 = vadd.f32 %v1053, %v59
    %v1104 = vadd.f32 %v1054, %v60
    %v1105 = vadd.f32 %v1055, %v61
    %v1106 = vadd.f32 %v1056, %v62
    %v1107 = vadd.f32 %v1057, %v63
    %v1108 = vadd.f32 %v1058, %v64
    %v1109 = vadd.f32 %v1059, %v65
    %v1110 = vadd.f32 %v1060, %v66
    %v1111 = vadd.f32 %v1061, %v67
    %v1112 = vadd.f32 %v1062, %v68
    %v1113 = vadd.f32 %v1063, %v69
    %v1114 = vadd.f32 %v1064, %v70
    %v1115 = vadd.f32 %v1065, %v71
    %v1116 = vadd.f32 %v1066, %v72
    %v1117 = vadd.f32 %v1067, %v73
    %v1118 = vadd.f32 %v1068, %v74
    %v1119 = vadd.f32 %v1069, %v75
    %v1120 = vadd.f32 %v1070, %v76
    %v1121 = vadd.f32 %v1071, %v77
    %v1122 = vadd.f32 %v1072, %v78
    %v1123 = vadd.f32 %v1073, %v79
    %v1124 = vadd.f32 %v1074, %v80
    %v1125 = vadd.f32 %v1075, %v81
    %v1126 = vadd.f32 %v1076, %v82
    %v1127 = vadd.f32 %v1077, %v83
    %v1128 = vadd.f32 %v1078, %v84
    %v1129 = vadd.f32 %v1079, %v85
    %v1130 = vadd.f32 %v1080, %v86
    %v1131 = vadd.f32 %v1081, %v87
    %v1132 = vadd.f32 %v1082, %v88
    %v1133 = vadd.f32 %v1083, %v89
    %v1134 = vadd.f32 %v1084, %v90
    %v1135 = vadd.f32 %v1085, %v91
    %v1136 = vadd.f32 %v1086, %v92
    %v1137 = vadd.f32 %v1087, %v93
    %v1138 = vadd.f32 %v1088, %v94
    %v1139 = vadd.f32 %v1089, %v95
    %v1140 = vadd.f32 %v1090, %v96
    %v1141 = vadd.f32 %v1091, %v97
    %v1142 = vadd.f32 %v1092, %v98
    %v1143 = vadd.f32 %v1093, %v99
    %1144 = vst [vmem:[#allocation7] sm:$0xff] %v1094
    %1145 = vst [vmem:[#allocation7 + $0x8] sm:$0xff] %v1095
    %1146 = vst [vmem:[#allocation7 + $0x10] sm:$0xff] %v1096
    %1147 = vst [vmem:[#allocation7 + $0x18] sm:$0xff] %v1097
    %1148 = vst [vmem:[#allocation7 + $0x20] sm:$0xff] %v1098
    %1149 = vst [vmem:[#allocation7 + $0x28] sm:$0xff] %v1099
    %1150 = vst [vmem:[#allocation7 + $0x30] sm:$0xff] %v1100
    %1151 = vst [vmem:[#allocation7 + $0x38] sm:$0xff] %v1101
    %1152 = vst [vmem:[#allocation7 + $0x40] sm:$0xff] %v1102
    %1153 = vst [vmem:[#allocation7 + $0x48] sm:$0xff] %v1103
    %1154 = vst [vmem:[#allocation7 + $0x50] sm:$0xff] %v1104
    %1155 = vst [vmem:[#allocation7 + $0x58] sm:$0xff] %v1105
    %1156 = vst [vmem:[#allocation7 + $0x60] sm:$0xff] %v1106
    %1157 = vst [vmem:[#allocation7 + $0x68] sm:$0xff] %v1107
    %1158 = vst [vmem:[#allocation7 + $0x70] sm:$0xff] %v1108
    %1159 = vst [vmem:[#allocation7 + $0x78] sm:$0xff] %v1109
    %1160 = vst [vmem:[#allocation7 + $0x80] sm:$0xff] %v1110
    %1161 = vst [vmem:[#allocation7 + $0x88] sm:$0xff] %v1111
    %1162 = vst [vmem:[#allocation7 + $0x90] sm:$0xff] %v1112
    %1163 = vst [vmem:[#allocation7 + $0x98] sm:$0xff] %v1113
    %1164 = vst [vmem:[#allocation7 + $0xa0] sm:$0xff] %v1114
    %1165 = vst [vmem:[#allocation7 + $0xa8] sm:$0xff] %v1115
    %1166 = vst [vmem:[#allocation7 + $0xb0] sm:$0xff] %v1116
    %1167 = vst [vmem:[#allocation7 + $0xb8] sm:$0xff] %v1117
    %1168 = vst [vmem:[#allocation7 + $0xc0] sm:$0xff] %v1118
    %1169 = vst [vmem:[#allocation7 + $0xc8] sm:$0xff] %v1119
    %1170 = vst [vmem:[#allocation7 + $0xd0] sm:$0xff] %v1120
    %1171 = vst [vmem:[#allocation7 + $0xd8] sm:$0xff] %v1121
    %1172 = vst [vmem:[#allocation7 + $0xe0] sm:$0xff] %v1122
    %1173 = vst [vmem:[#allocation7 + $0xe8] sm:$0xff] %v1123
    %1174 = vst [vmem:[#allocation7 + $0xf0] sm:$0xff] %v1124
    %1175 = vst [vmem:[#allocation7 + $0xf8] sm:$0xff] %v1125
    %1176 = vst [vmem:[#allocation7 + $0x100] sm:$0xff] %v1126
    %1177 = vst [vmem:[#allocation7 + $0x108] sm:$0xff] %v1127
    %1178 = vst [vmem:[#allocation7 + $0x110] sm:$0xff] %v1128
    %1179 = vst [vmem:[#allocation7 + $0x118] sm:$0xff] %v1129
    %1180 = vst [vmem:[#allocation7 + $0x120] sm:$0xff] %v1130
    %1181 = vst [vmem:[#allocation7 + $0x128] sm:$0xff] %v1131
    %1182 = vst [vmem:[#allocation7 + $0x130] sm:$0xff] %v1132
    %1183 = vst [vmem:[#allocation7 + $0x138] sm:$0xff] %v1133
    %1184 = vst [vmem:[#allocation7 + $0x140] sm:$0xff] %v1134
    %1185 = vst [vmem:[#allocation7 + $0x148] sm:$0xff] %v1135
    %1186 = vst [vmem:[#allocation7 + $0x150] sm:$0xff] %v1136
    %1187 = vst [vmem:[#allocation7 + $0x158] sm:$0xff] %v1137
    %1188 = vst [vmem:[#allocation7 + $0x160] sm:$0xff] %v1138
    %1189 = vst [vmem:[#allocation7 + $0x168] sm:$0xff] %v1139
    %1190 = vst [vmem:[#allocation7 + $0x170] sm:$0xff] %v1140
    %1191 = vst [vmem:[#allocation7 + $0x178] sm:$0xff] %v1141
    %1192 = vst [vmem:[#allocation7 + $0x180] sm:$0xff] %v1142
    %1193 = vst [vmem:[#allocation7 + $0x188] sm:$0xff] %v1143
    // Predicated region
    $region30: #{tpu_custom_call.1} parent=1 // pred_check
      _
    $region31: #{tpu_custom_call.1} parent=1 // pred_check_branch
      %1195 = sbr.rel (0) target = $region33
    $region32: #{tpu_custom_call.1} parent=1 // pred_region
      %s1197 = ssub.s32 6400, 6400
      %1198 = vsyncadd [#allocation4], %s1197
      %s1199 = sshll.u32 [#allocation7], 4
      %s1200 = int_to_ptr.vmem [resolvable:$true] %s1199
      %1205 = dma.vmem_to_hbm [thread:$0]  %s1200, 6400, %s5, [#allocation4], 128, 128, 8
    $region33: #{tpu_custom_call.1} parent=1 // pred_fallthru
      _
    // Predicated region
    $region34: #{tpu_custom_call.1} parent=1 // pred_check
      _
    $region35: #{tpu_custom_call.1} parent=1 // pred_check_branch
      %1207 = sbr.rel (0) target = $region37
    $region36: #{tpu_custom_call.1} parent=1 // pred_region
      %1208 = dma.done [#allocation4], 6400
    $region37: #{tpu_custom_call.1} parent=1 // pred_fallthru
      _
    %1209 = vsyncpa [#allocation3], 1
    %1210 = vsyncpa [#allocation6], 1
    %1211 = vsyncpa [#allocation4], 1

</llo_original>
